<compile_context>
chip_gen: v7x
topology: tpu7x:2x2x1
jax: 0.10.0
libtpu: 0.0.40
codegen_flags: <defaults>
</compile_context>

<pallas_src>
import math

import jax
import jax.numpy as jnp
from jax.experimental import pallas as pl
from jax.experimental.pallas import tpu as pltpu


def _pick_spatial_tile(S, bytes_per_lane, target_bytes):
    """Largest lane tile (multiple of 128, or the full extent S) so that one
    output block is ~target_bytes; prefers tiles that divide S exactly."""
    if S * bytes_per_lane <= target_bytes or S <= 512:
        return S                          # full extent: always a legal block dim
    cap = max(128, (target_bytes // bytes_per_lane) // 128 * 128)
    if cap >= S:
        return S
    t = cap
    while t >= 128:                       # prefer an exact divisor (no tail block)
        if S % t == 0:
            return t
        t -= 128
    return cap                            # fall back: cdiv grid, masked tail block


def concat_pallas(x1, x2, *, block_bytes_target=2 * 1024 * 1024):
    """Pad-to-match (as in the PyTorch module) then channel-concat via Pallas."""
    N, C1, H1, W1 = x1.shape
    N2, C2, H2, W2 = x2.shape
    assert N == N2, "batch dims must match"
    assert x1.dtype == x2.dtype, "dtypes must match"
    dtype = x1.dtype
    itemsize = jnp.dtype(dtype).itemsize

    # --- pad the smaller tensor: one XLA pad op (see header) -----------------
    diff = H1 - H2
    p_hi = math.ceil(abs(diff / 2))       # left / top pad
    p_lo = math.floor(abs(diff / 2))      # right / bottom pad
    if diff < 0:
        x1 = jnp.pad(x1, ((0, 0), (0, 0), (p_hi, p_lo), (p_hi, p_lo)))
    elif diff > 0:
        x2 = jnp.pad(x2, ((0, 0), (0, 0), (p_hi, p_lo), (p_hi, p_lo)))
    assert x1.shape[2:] == x2.shape[2:], \
        "Concat requires spatial dims to line up after padding (as in PyTorch)"
    Hout, Wout = x1.shape[2], x1.shape[3]
    Cout = C1 + C2
    S = Hout * Wout

    # Layout plumbing only (contiguous row-major reshapes are free).
    x1f = x1.reshape(N, C1, S)
    x2f = x2.reshape(N, C2, S)

    # --- tiling ---------------------------------------------------------------
    ST = _pick_spatial_tile(S, Cout * itemsize, block_bytes_target)
    ns = int(pl.cdiv(S, ST))
    out_blk_bytes = Cout * ST * itemsize

    # Fold batch samples into one block while per-sample blocks are small.
    BT = 1
    if N > 1 and out_blk_bytes < block_bytes_target:
        BT = int(min(N, max(1, block_bytes_target // max(1, out_blk_bytes))))
        while N % BT != 0:                # keep the batch grid exact
            BT -= 1
    nb = N // BT

    # VMEM budget: double-buffered in1 + in2 + out blocks, + headroom.
    block_bytes = (C1 + C2 + Cout) * ST * BT * itemsize
    vmem_limit = int(min(48 * 2**20, max(16 * 2**20, 2 * block_bytes + (2 << 20))))
    total_bytes = int((x1f.size + x2f.size + N * Cout * S) * itemsize)

    def kernel(x1_ref, x2_ref, o_ref):
        # Two contiguous, lane-dense channel-slab stores per tile; no masked
        # per-row stores, no lane rotates, no dynamic indexing.  (The C1 channel
        # boundary may sit mid sublane-pack; both writes land inside this single
        # output block, so the straddling tile is resolved within one grid step.)
        o_ref[:, 0:C1, :] = x1_ref[...]
        o_ref[:, C1:Cout, :] = x2_ref[...]

    out_flat = pl.pallas_call(
        kernel,
        out_shape=jax.ShapeDtypeStruct((N, Cout, S), dtype),
        grid=(nb, ns),
        in_specs=[
            pl.BlockSpec((BT, C1, ST), lambda n, s: (n, 0, s)),
            pl.BlockSpec((BT, C2, ST), lambda n, s: (n, 0, s)),
        ],
        out_specs=pl.BlockSpec((BT, Cout, ST), lambda n, s: (n, 0, s)),
        compiler_params=pltpu.CompilerParams(
            dimension_semantics=("parallel", "parallel"),
            vmem_limit_bytes=vmem_limit),
        cost_estimate=pl.CostEstimate(
            flops=0, transcendentals=0, bytes_accessed=total_bytes),
    )(x1f, x2f)

    # Free reshape back to NCHW.
    return out_flat.reshape(N, Cout, Hout, Wout)


def concat_ref(x1, x2):
    """Pure-JAX reference mirroring the PyTorch module."""
    diff = x1.shape[2] - x2.shape[2]
    p_hi = math.ceil(abs(diff / 2))
    p_lo = math.floor(abs(diff / 2))
    if diff < 0:
        x1 = jnp.pad(x1, ((0, 0), (0, 0), (p_hi, p_lo), (p_hi, p_lo)))
    elif diff > 0:
        x2 = jnp.pad(x2, ((0, 0), (0, 0), (p_hi, p_lo), (p_hi, p_lo)))
    return jnp.concatenate([x1, x2], axis=1)


if __name__ == "__main__":
    key = jax.random.PRNGKey(0)
    k1, k2, k3, k4 = jax.random.split(key, 4)

    # Primary case: inputs1 (2,4,16,16), inputs2 (2,6,12,12) -> diff = 4 > 0,
    # inputs2 padded by 2 on every side, output (2, 10, 16, 16).
    x1 = jax.random.normal(k1, (2, 4, 16, 16), dtype=jnp.float32)
    x2 = jax.random.normal(k2, (2, 6, 12, 12), dtype=jnp.float32)
    out = jax.block_until_ready(concat_pallas(x1, x2))
    ref = concat_ref(x1, x2)
    assert out.shape == ref.shape, (out.shape, ref.shape)
    assert jnp.array_equal(out, ref), "Pallas concat mismatch (diff > 0)"

    # diff < 0: inputs1 padded (asymmetric pad: p_hi=2, p_lo=1).
    y1 = jax.random.normal(k3, (2, 3, 11, 11), dtype=jnp.float32)
    y2 = jax.random.normal(k4, (2, 5, 14, 14), dtype=jnp.float32)
    out2 = jax.block_until_ready(concat_pallas(y1, y2))
    ref2 = concat_ref(y1, y2)
    assert out2.shape == ref2.shape, (out2.shape, ref2.shape)
    assert jnp.array_equal(out2, ref2), "Pallas concat mismatch (diff < 0)"

    # diff == 0: plain channel concat.
    z1 = jax.random.normal(k1, (2, 4, 8, 8), dtype=jnp.float32)
    z2 = jax.random.normal(k2, (2, 2, 8, 8), dtype=jnp.float32)
    out3 = jax.block_until_ready(concat_pallas(z1, z2))
    ref3 = concat_ref(z1, z2)
    assert jnp.array_equal(out3, ref3), "Pallas concat mismatch (diff == 0)"

    # Exercise the multi-step tiled grid path with a deliberately tiny block
    # target (spatial tiles of 128 lanes, grid (2, 8)).
    w1 = jax.random.normal(k3, (2, 4, 32, 32), dtype=jnp.float32)
    w2 = jax.random.normal(k4, (2, 6, 28, 28), dtype=jnp.float32)
    out4 = jax.block_until_ready(concat_pallas(w1, w2, block_bytes_target=8 * 1024))
    ref4 = concat_ref(w1, w2)
    assert jnp.array_equal(out4, ref4), "Pallas concat mismatch (tiled grid)"

    print("KERNEL_OK")
</pallas_src>

<mosaic_0001>
module attributes {stable_mosaic.version = 11 : i64} {
  func.func @kernel(%arg0: i32, %arg1: i32, %arg2: memref<2x4x256xf32, #tpu.memory_space<vmem>>, %arg3: memref<2x6x256xf32, #tpu.memory_space<vmem>>, %arg4: memref<2x10x256xf32, #tpu.memory_space<vmem>>) attributes {dimension_semantics = [#tpu.dimension_semantics<parallel>, #tpu.dimension_semantics<parallel>], iteration_bounds = array<i64: 1, 1>, scalar_prefetch = 0 : i64, scratch_operands = 0 : i64, tpu.core_type = #tpu.core_type<tc>, window_params = [{transform_indices = @transform_0, window_bounds = array<i64: 2, 4, 256>}, {transform_indices = @transform_1, window_bounds = array<i64: 2, 6, 256>}, {transform_indices = @transform_2, window_bounds = array<i64: 2, 10, 256>}]} {
    %c0 = arith.constant 0 : index
    %c0_0 = arith.constant 0 : index
    %c0_1 = arith.constant 0 : index
    %0 = vector.load %arg2[%c0, %c0_0, %c0_1] : memref<2x4x256xf32, #tpu.memory_space<vmem>>, vector<2x4x256xf32>
    %c0_2 = arith.constant 0 : index
    %c0_3 = arith.constant 0 : index
    %c0_4 = arith.constant 0 : index
    %1 = vector.load %arg4[%c0_2, %c0_3, %c0_4] : memref<2x10x256xf32, #tpu.memory_space<vmem>>, vector<2x4x256xf32>
    tpu.vector_store %arg4[%c0_2, %c0_3, %c0_4], %0 {strides = array<i32>} : memref<2x10x256xf32, #tpu.memory_space<vmem>>, vector<2x4x256xf32>,
    %c0_5 = arith.constant 0 : index
    %c0_6 = arith.constant 0 : index
    %c0_7 = arith.constant 0 : index
    %2 = vector.load %arg3[%c0_5, %c0_6, %c0_7] : memref<2x6x256xf32, #tpu.memory_space<vmem>>, vector<2x6x256xf32>
    %c0_8 = arith.constant 0 : index
    %c4 = arith.constant 4 : index
    %c0_9 = arith.constant 0 : index
    %3 = vector.load %arg4[%c0_8, %c4, %c0_9] : memref<2x10x256xf32, #tpu.memory_space<vmem>>, vector<2x6x256xf32>
    tpu.vector_store %arg4[%c0_8, %c4, %c0_9], %2 {strides = array<i32>} : memref<2x10x256xf32, #tpu.memory_space<vmem>>, vector<2x6x256xf32>,
    return
  }
  func.func @transform_0(%arg0: i32, %arg1: i32) -> (i32, i32, i32) {
    %c0_i32 = arith.constant 0 : i32
    %c0_i32_0 = arith.constant 0 : i32
    return %arg0, %c0_i32, %arg1 : i32, i32, i32
  }
  func.func @transform_1(%arg0: i32, %arg1: i32) -> (i32, i32, i32) {
    %c0_i32 = arith.constant 0 : i32
    %c0_i32_0 = arith.constant 0 : i32
    return %arg0, %c0_i32, %arg1 : i32, i32, i32
  }
  func.func @transform_2(%arg0: i32, %arg1: i32) -> (i32, i32, i32) {
    %c0_i32 = arith.constant 0 : i32
    %c0_i32_0 = arith.constant 0 : i32
    return %arg0, %c0_i32, %arg1 : i32, i32, i32
  }
}

</mosaic_0001>

<llo_original>
// kernel: tpu_custom_call.1
$region0: #{tpu_custom_call.1}
  #allocation0 [shape = 'u32[]', space=smem, size = 0x4, offset = 0x4, fixed_abs, tag = 'smem constant byte address 0x4 - core index']
  #allocation1 [shape = 'u32[144,128]{1,0:T(1,128)}', space=vmem, size = 0x12000, scoped, tag = 'internal scratch']
  %s0 = inlined_call_operand.vmem [shape: f32[2,4,256], index: 0, kind: input, shape index: {}]
  %s1 = inlined_call_operand.vmem [shape: f32[2,6,256], index: 1, kind: input, shape index: {}]
  %s2 = inlined_call_operand.vmem [shape: f32[2,10,256], index: 2, kind: output, shape index: {}]
  %s3 = sld [smem:[#allocation0]]
  $region18: #{tpu_custom_call.1} parent=0
    _
  %s5 = ssub.s32 1, %s3
  %s6 = scalar_select 0, %s5, %s3
  // Predicated region
  $region2: #{tpu_custom_call.1} parent=0 // pred_check
    _
  $region3: #{tpu_custom_call.1} parent=0 // pred_check_branch
    %8 = sbr.rel (0) target = $region5
  $region4: #{tpu_custom_call.1} parent=0 // pred_region
    _
  $region5: #{tpu_custom_call.1} parent=0 // pred_fallthru
    _
  // Predicated region
  $region6: #{tpu_custom_call.1} parent=0 // pred_check
    _
  $region7: #{tpu_custom_call.1} parent=0 // pred_check_branch
    %10 = sbr.rel (0) target = $region9
  $region8: #{tpu_custom_call.1} parent=0 // pred_region
    _
  $region9: #{tpu_custom_call.1} parent=0 // pred_fallthru
    _
  %v11 = vld [vmem:[%s0] sm:$0xff]
  %v12 = vld [vmem:[%s0 + $0x8] sm:$0xff]
  %v15 = vcombine.high %v11, %v11
  %v16 = vcombine.high %v12, %v12
  %19 = vst [vmem:[%s2] sm:$0xf] %v11
  %20 = vst [vmem:[%s2 + $0x8] sm:$0xf] %v15
  %21 = vst [vmem:[%s2 + $0x20] sm:$0xf] %v12
  %22 = vst [vmem:[%s2 + $0x28] sm:$0xf] %v16
  %v23 = vld [vmem:[%s1] sm:$0x3f]
  %v24 = vld [vmem:[%s1 + $0x8] sm:$0x3f]
  %v25 = vld [vmem:[%s1 + $0x10] sm:$0x3f]
  %v26 = vld [vmem:[%s1 + $0x18] sm:$0x3f]
  %v31 = vrot.slane %v23, 4
  %v32 = vrot.slane %v24, 4
  %v33 = vrot.slane %v25, 4
  %v34 = vrot.slane %v26, 4
  %39 = vst [vmem:[%s2] sm:$0xf0] %v31
  %40 = vst [vmem:[%s2 + $0x8] sm:$0xf0] %v32
  %41 = vst [vmem:[%s2 + $0x10] sm:$0x3] %v31
  %42 = vst [vmem:[%s2 + $0x18] sm:$0x3] %v32
  %43 = vst [vmem:[%s2 + $0x20] sm:$0xf0] %v33
  %44 = vst [vmem:[%s2 + $0x28] sm:$0xf0] %v34
  %45 = vst [vmem:[%s2 + $0x30] sm:$0x3] %v33
  %46 = vst [vmem:[%s2 + $0x38] sm:$0x3] %v34
  // Predicated region
  $region10: #{tpu_custom_call.1} parent=0 // pred_check
    _
  $region11: #{tpu_custom_call.1} parent=0 // pred_check_branch
    %48 = sbr.rel (0) target = $region13
  $region12: #{tpu_custom_call.1} parent=0 // pred_region
    _
  $region13: #{tpu_custom_call.1} parent=0 // pred_fallthru
    _
  // Predicated region
  $region14: #{tpu_custom_call.1} parent=0 // pred_check
    _
  $region15: #{tpu_custom_call.1} parent=0 // pred_check_branch
    %50 = sbr.rel (0) target = $region17
  $region16: #{tpu_custom_call.1} parent=0 // pred_region
    _
  $region17: #{tpu_custom_call.1} parent=0 // pred_fallthru
    _

</llo_original>
